<compile_context>
chip_gen: v5e
topology: v5e:2x2
jax: 0.10.0
libtpu: 0.0.40
codegen_flags: <defaults>
</compile_context>

<pallas_src>
import jax
import jax.numpy as jnp
from jax.experimental import pallas as pl
from jax.experimental.pallas import tpu as pltpu


def soft_q_kernel(x_ref, a_ref, w1x_ref, w1a_ref, w2_ref, bn_ref, w3_ref,
                  b3_ref, out_ref):
    eps = jnp.float32(1e-5)
    inv_b = jnp.float32(1.0 / x_ref.shape[0])            # static batch size

    # --- Linear(obs+act -> H, bias=False); concat fused: x@W1x + a@W1a -------
    # bf16 casts happen here (cheap VPU ops) so the wrapper stays op-free;
    # the MXU sees single-pass bf16 operands with f32 accumulation.
    h = (jnp.dot(x_ref[...].astype(jnp.bfloat16),
                 w1x_ref[...].astype(jnp.bfloat16),
                 preferred_element_type=jnp.float32)
         + jnp.dot(a_ref[...].astype(jnp.bfloat16),
                   w1a_ref[...].astype(jnp.bfloat16),
                   preferred_element_type=jnp.float32))

    # --- BatchNorm1d #1 (training-mode batch stats), single pass, f32 --------
    s1 = jnp.sum(h, axis=0, keepdims=True)               # (1, H)
    s2 = jnp.sum(h * h, axis=0, keepdims=True)           # (1, H)
    mean = s1 * inv_b
    var = s2 * inv_b - mean * mean                       # biased variance
    scale = jax.lax.rsqrt(var + eps) * bn_ref[0:1, :]    # gamma1 * inv_std
    shift = bn_ref[1:2, :] - mean * scale                # beta1 - mean*scale
    h = jnp.maximum(h * scale + shift, 0.0)              # BN + ReLU (fused FMA)

    # --- Linear(H -> H, bias=False) -------------------------------------------
    h = jnp.dot(h.astype(jnp.bfloat16), w2_ref[...].astype(jnp.bfloat16),
                preferred_element_type=jnp.float32)

    # --- BatchNorm1d #2 + ReLU -------------------------------------------------
    s1 = jnp.sum(h, axis=0, keepdims=True)
    s2 = jnp.sum(h * h, axis=0, keepdims=True)
    mean = s1 * inv_b
    var = s2 * inv_b - mean * mean
    scale = jax.lax.rsqrt(var + eps) * bn_ref[2:3, :]
    shift = bn_ref[3:4, :] - mean * scale
    h = jnp.maximum(h * scale + shift, 0.0)

    # --- Linear(H -> 1) with bias: VPU mul + XLU lane reduction ---------------
    q = jnp.sum(h * w3_ref[...], axis=-1, keepdims=True) + b3_ref[0, 0]
    out_ref[...] = q                                      # (B, 1)
    # Note: last-dim=1 output means masked stores; negligible at small B.
    # For huge replay batches, emit (1, B) lane-dense and transpose outside.


def soft_q_forward(x, a, params):
    """x: (B, obs_dim) f32, a: (B, action_dim) f32  ->  (B, 1) q-values (f32).

    Wrapper is intentionally op-free: all operands go straight into the
    pallas_call in the layout produced by init_params.
    """
    B, obs_dim = x.shape
    action_dim = a.shape[1]
    H = params["w1x"].shape[1]

    vmem = pl.BlockSpec(memory_space=pltpu.MemorySpace.VMEM)
    smem = pl.BlockSpec(memory_space=pltpu.MemorySpace.SMEM)

    flops = 2 * B * (obs_dim * H + action_dim * H + H * H + H)
    bytes_accessed = 4 * (x.size + a.size + params["w1x"].size
                          + params["w1a"].size + params["w2"].size
                          + params["bn"].size + params["w3"].size
                          + params["b3"].size + B)
    cost = pl.CostEstimate(flops=flops, transcendentals=2 * H,
                           bytes_accessed=bytes_accessed)

    return pl.pallas_call(
        soft_q_kernel,
        out_shape=jax.ShapeDtypeStruct((B, 1), jnp.float32),
        in_specs=[vmem, vmem, vmem, vmem, vmem, vmem, vmem, smem],
        out_specs=vmem,
        cost_estimate=cost,
    )(x, a, params["w1x"], params["w1a"], params["w2"], params["bn"],
      params["w3"], params["b3"])


def init_params(key, obs_dim, action_dim, hidden_dim):
    """Deterministic synthetic init mirroring the PyTorch module's weights.

    Layout (one-time conversion from PyTorch, so the per-call wrapper has no
    XLA ops):
      w1x = mlp[0].weight.T[:obs_dim]      (obs_dim, H)
      w1a = mlp[0].weight.T[obs_dim:]      (action_dim, H)
      w2  = mlp[3].weight.T                (H, H)
      bn  = stack([gamma1, beta1, gamma2, beta2])   (4, H)
      w3  = mlp[6].weight                  (1, H)   (PyTorch-native layout)
      b3  = mlp[6].bias                    (1, 1)   (SMEM scalar)
    """
    d_in = obs_dim + action_dim
    k1, k2, k3, k4 = jax.random.split(key, 4)

    def uniform(k, shape, fan_in):
        bound = 1.0 / jnp.sqrt(jnp.float32(fan_in))
        return jax.random.uniform(k, shape, jnp.float32, -bound, bound)

    w1 = uniform(k1, (d_in, hidden_dim), d_in)
    bn = jnp.concatenate([jnp.ones((1, hidden_dim), jnp.float32),    # gamma1
                          jnp.zeros((1, hidden_dim), jnp.float32),   # beta1
                          jnp.ones((1, hidden_dim), jnp.float32),    # gamma2
                          jnp.zeros((1, hidden_dim), jnp.float32)],  # beta2
                         axis=0)
    return {
        "w1x": w1[:obs_dim, :],
        "w1a": w1[obs_dim:, :],
        "w2": uniform(k2, (hidden_dim, hidden_dim), hidden_dim),
        "bn": bn,
        "w3": uniform(k3, (1, hidden_dim), hidden_dim),
        "b3": uniform(k4, (1, 1), hidden_dim),
    }


def soft_q_reference(x, a, params, eps=1e-5):
    """Pure-JAX f32 reference of the PyTorch forward (training-mode BN)."""
    w1 = jnp.concatenate([params["w1x"], params["w1a"]], axis=0)
    h = jnp.concatenate([x, a], axis=1).astype(jnp.float32) @ w1
    m, v = jnp.mean(h, 0, keepdims=True), jnp.var(h, 0, keepdims=True)
    h = (h - m) / jnp.sqrt(v + eps) * params["bn"][0:1] + params["bn"][1:2]
    h = jnp.maximum(h, 0.0)
    h = h @ params["w2"]
    m, v = jnp.mean(h, 0, keepdims=True), jnp.var(h, 0, keepdims=True)
    h = (h - m) / jnp.sqrt(v + eps) * params["bn"][2:3] + params["bn"][3:4]
    h = jnp.maximum(h, 0.0)
    return h @ params["w3"].T + params["b3"]


if __name__ == "__main__":
    # Small shapes consistent with the module: obs_dim=16, action_dim=8,
    # hidden_dim=32, batch=8.
    obs_dim, action_dim, hidden_dim, batch = 16, 8, 32, 8

    key = jax.random.PRNGKey(0)
    kx, ka, kp = jax.random.split(key, 3)
    x = jax.random.normal(kx, (batch, obs_dim), jnp.float32)
    a = jax.random.normal(ka, (batch, action_dim), jnp.float32)
    params = init_params(kp, obs_dim, action_dim, hidden_dim)

    q = soft_q_forward(x, a, params)
    q = jax.block_until_ready(q)

    q_ref = soft_q_reference(x, a, params)
    assert q.shape == (batch, 1)
    # bf16 MXU operands -> loosened tolerance vs. the pure-f32 reference.
    assert jnp.allclose(q, q_ref, atol=5e-2, rtol=5e-2), (q, q_ref)

    print("KERNEL_OK")
</pallas_src>

<mosaic_0001>
module attributes {stable_mosaic.version = 11 : i64} {
  func.func @soft_q_kernel(%arg0: memref<8x16xf32, #tpu.memory_space<vmem>>, %arg1: memref<8x8xf32, #tpu.memory_space<vmem>>, %arg2: memref<16x32xf32, #tpu.memory_space<vmem>>, %arg3: memref<8x32xf32, #tpu.memory_space<vmem>>, %arg4: memref<32x32xf32, #tpu.memory_space<vmem>>, %arg5: memref<4x32xf32, #tpu.memory_space<vmem>>, %arg6: memref<1x32xf32, #tpu.memory_space<vmem>>, %arg7: memref<1x1xf32, #tpu.memory_space<smem>>, %arg8: memref<8x1xf32, #tpu.memory_space<vmem>>) attributes {dimension_semantics = [], scalar_prefetch = 0 : i64, scratch_operands = 0 : i64, tpu.core_type = #tpu.core_type<tc>} {
    %c0 = arith.constant 0 : index
    %c0_0 = arith.constant 0 : index
    %0 = vector.load %arg0[%c0, %c0_0] : memref<8x16xf32, #tpu.memory_space<vmem>>, vector<8x16xf32>
    %1 = arith.truncf %0 : vector<8x16xf32> to vector<8x16xbf16>
    %c0_1 = arith.constant 0 : index
    %c0_2 = arith.constant 0 : index
    %2 = vector.load %arg2[%c0_1, %c0_2] : memref<16x32xf32, #tpu.memory_space<vmem>>, vector<16x32xf32>
    %3 = arith.truncf %2 : vector<16x32xf32> to vector<16x32xbf16>
    %cst = arith.constant dense<0.000000e+00> : vector<8x32xf32>
    %4 = tpu.matmul %1, %3, %cst {dimension_numbers = #tpu.dot_dimension_numbers<[1], [0], [0], [1], [0, 0, 1, 1], [], []>} : vector<8x16xbf16>, vector<16x32xbf16>, vector<8x32xf32> -> vector<8x32xf32>
    %c0_3 = arith.constant 0 : index
    %c0_4 = arith.constant 0 : index
    %5 = vector.load %arg1[%c0_3, %c0_4] : memref<8x8xf32, #tpu.memory_space<vmem>>, vector<8x8xf32>
    %6 = arith.truncf %5 : vector<8x8xf32> to vector<8x8xbf16>
    %c0_5 = arith.constant 0 : index
    %c0_6 = arith.constant 0 : index
    %7 = vector.load %arg3[%c0_5, %c0_6] : memref<8x32xf32, #tpu.memory_space<vmem>>, vector<8x32xf32>
    %8 = arith.truncf %7 : vector<8x32xf32> to vector<8x32xbf16>
    %cst_7 = arith.constant dense<0.000000e+00> : vector<8x32xf32>
    %9 = tpu.matmul %6, %8, %cst_7 {dimension_numbers = #tpu.dot_dimension_numbers<[1], [0], [0], [1], [0, 0, 1, 1], [], []>} : vector<8x8xbf16>, vector<8x32xbf16>, vector<8x32xf32> -> vector<8x32xf32>
    %10 = arith.addf %4, %9 : vector<8x32xf32>
    %cst_8 = arith.constant dense<0.000000e+00> : vector<32xf32>
    %11 = vector.multi_reduction <add>, %10, %cst_8 [0] : vector<8x32xf32> to vector<32xf32>
    %12 = vector.shape_cast %11 : vector<32xf32> to vector<1x32xf32>
    %13 = arith.mulf %10, %10 : vector<8x32xf32>
    %cst_9 = arith.constant dense<0.000000e+00> : vector<32xf32>
    %14 = vector.multi_reduction <add>, %13, %cst_9 [0] : vector<8x32xf32> to vector<32xf32>
    %15 = vector.shape_cast %14 : vector<32xf32> to vector<1x32xf32>
    %cst_10 = arith.constant 1.250000e-01 : f32
    %16 = vector.broadcast %cst_10 : f32 to vector<1x32xf32>
    %17 = arith.mulf %12, %16 : vector<1x32xf32>
    %cst_11 = arith.constant 1.250000e-01 : f32
    %18 = vector.broadcast %cst_11 : f32 to vector<1x32xf32>
    %19 = arith.mulf %15, %18 : vector<1x32xf32>
    %20 = arith.mulf %17, %17 : vector<1x32xf32>
    %21 = arith.subf %19, %20 : vector<1x32xf32>
    %cst_12 = arith.constant 9.99999974E-6 : f32
    %22 = vector.broadcast %cst_12 : f32 to vector<1x32xf32>
    %23 = arith.addf %21, %22 : vector<1x32xf32>
    %24 = math.rsqrt %23 : vector<1x32xf32>
    %c0_13 = arith.constant 0 : index
    %c0_14 = arith.constant 0 : index
    %25 = vector.load %arg5[%c0_13, %c0_14] : memref<4x32xf32, #tpu.memory_space<vmem>>, vector<1x32xf32>
    %26 = arith.mulf %24, %25 : vector<1x32xf32>
    %c1 = arith.constant 1 : index
    %c0_15 = arith.constant 0 : index
    %27 = vector.load %arg5[%c1, %c0_15] : memref<4x32xf32, #tpu.memory_space<vmem>>, vector<1x32xf32>
    %28 = arith.mulf %17, %26 : vector<1x32xf32>
    %29 = arith.subf %27, %28 : vector<1x32xf32>
    %30 = vector.broadcast %26 : vector<1x32xf32> to vector<8x32xf32>
    %31 = arith.mulf %10, %30 : vector<8x32xf32>
    %32 = vector.broadcast %29 : vector<1x32xf32> to vector<8x32xf32>
    %33 = arith.addf %31, %32 : vector<8x32xf32>
    %cst_16 = arith.constant 0.000000e+00 : f32
    %34 = vector.broadcast %cst_16 : f32 to vector<8x32xf32>
    %35 = arith.maximumf %33, %34 : vector<8x32xf32>
    %36 = arith.truncf %35 : vector<8x32xf32> to vector<8x32xbf16>
    %c0_17 = arith.constant 0 : index
    %c0_18 = arith.constant 0 : index
    %37 = vector.load %arg4[%c0_17, %c0_18] : memref<32x32xf32, #tpu.memory_space<vmem>>, vector<32x32xf32>
    %38 = arith.truncf %37 : vector<32x32xf32> to vector<32x32xbf16>
    %cst_19 = arith.constant dense<0.000000e+00> : vector<8x32xf32>
    %39 = tpu.matmul %36, %38, %cst_19 {dimension_numbers = #tpu.dot_dimension_numbers<[1], [0], [0], [1], [0, 0, 1, 1], [], []>} : vector<8x32xbf16>, vector<32x32xbf16>, vector<8x32xf32> -> vector<8x32xf32>
    %cst_20 = arith.constant dense<0.000000e+00> : vector<32xf32>
    %40 = vector.multi_reduction <add>, %39, %cst_20 [0] : vector<8x32xf32> to vector<32xf32>
    %41 = vector.shape_cast %40 : vector<32xf32> to vector<1x32xf32>
    %42 = arith.mulf %39, %39 : vector<8x32xf32>
    %cst_21 = arith.constant dense<0.000000e+00> : vector<32xf32>
    %43 = vector.multi_reduction <add>, %42, %cst_21 [0] : vector<8x32xf32> to vector<32xf32>
    %44 = vector.shape_cast %43 : vector<32xf32> to vector<1x32xf32>
    %cst_22 = arith.constant 1.250000e-01 : f32
    %45 = vector.broadcast %cst_22 : f32 to vector<1x32xf32>
    %46 = arith.mulf %41, %45 : vector<1x32xf32>
    %cst_23 = arith.constant 1.250000e-01 : f32
    %47 = vector.broadcast %cst_23 : f32 to vector<1x32xf32>
    %48 = arith.mulf %44, %47 : vector<1x32xf32>
    %49 = arith.mulf %46, %46 : vector<1x32xf32>
    %50 = arith.subf %48, %49 : vector<1x32xf32>
    %cst_24 = arith.constant 9.99999974E-6 : f32
    %51 = vector.broadcast %cst_24 : f32 to vector<1x32xf32>
    %52 = arith.addf %50, %51 : vector<1x32xf32>
    %53 = math.rsqrt %52 : vector<1x32xf32>
    %c2 = arith.constant 2 : index
    %c0_25 = arith.constant 0 : index
    %54 = vector.load %arg5[%c2, %c0_25] : memref<4x32xf32, #tpu.memory_space<vmem>>, vector<1x32xf32>
    %55 = arith.mulf %53, %54 : vector<1x32xf32>
    %c3 = arith.constant 3 : index
    %c0_26 = arith.constant 0 : index
    %56 = vector.load %arg5[%c3, %c0_26] : memref<4x32xf32, #tpu.memory_space<vmem>>, vector<1x32xf32>
    %57 = arith.mulf %46, %55 : vector<1x32xf32>
    %58 = arith.subf %56, %57 : vector<1x32xf32>
    %59 = vector.broadcast %55 : vector<1x32xf32> to vector<8x32xf32>
    %60 = arith.mulf %39, %59 : vector<8x32xf32>
    %61 = vector.broadcast %58 : vector<1x32xf32> to vector<8x32xf32>
    %62 = arith.addf %60, %61 : vector<8x32xf32>
    %cst_27 = arith.constant 0.000000e+00 : f32
    %63 = vector.broadcast %cst_27 : f32 to vector<8x32xf32>
    %64 = arith.maximumf %62, %63 : vector<8x32xf32>
    %c0_28 = arith.constant 0 : index
    %c0_29 = arith.constant 0 : index
    %65 = vector.load %arg6[%c0_28, %c0_29] : memref<1x32xf32, #tpu.memory_space<vmem>>, vector<1x32xf32>
    %66 = vector.broadcast %65 : vector<1x32xf32> to vector<8x32xf32>
    %67 = arith.mulf %64, %66 : vector<8x32xf32>
    %cst_30 = arith.constant dense<0.000000e+00> : vector<8xf32>
    %68 = vector.multi_reduction <add>, %67, %cst_30 [1] : vector<8x32xf32> to vector<8xf32>
    %69 = vector.shape_cast %68 : vector<8xf32> to vector<8x1xf32>
    %c0_31 = arith.constant 0 : index
    %c0_32 = arith.constant 0 : index
    %70 = memref.load %arg7[%c0_31, %c0_32] : memref<1x1xf32, #tpu.memory_space<smem>>
    %71 = vector.broadcast %70 : f32 to vector<8x1xf32>
    %72 = arith.addf %69, %71 : vector<8x1xf32>
    %c0_33 = arith.constant 0 : index
    %c0_34 = arith.constant 0 : index
    %73 = vector.load %arg8[%c0_33, %c0_34] : memref<8x1xf32, #tpu.memory_space<vmem>>, vector<8x1xf32>
    tpu.vector_store %arg8[%c0_33, %c0_34], %72 {strides = array<i32>} : memref<8x1xf32, #tpu.memory_space<vmem>>, vector<8x1xf32>,
    return
  }
}

</mosaic_0001>

<llo_original>
// kernel: tpu_custom_call.1
$region0: #{tpu_custom_call.1}
  #allocation0 [shape = 'u32[]', space=smem, size = 0x4, offset = 0x4, fixed_abs, tag = 'smem constant byte address 0x4 - core index']
  #allocation1 [shape = 'u32[72,128]{1,0:T(1,128)}', space=vmem, size = 0x9000, scoped, tag = 'internal scratch']
  #allocation2 [shape = 'f32[1,1]{1,0:T(1,128)S(6)}', space=smem, size = 0x200, scoped, tag = 'scoped memory for tpu_custom_call.1']
  %s0 = inlined_call_operand.hbm [shape: f32[8,16], index: 0, kind: input, shape index: {}]
  %s1 = inlined_call_operand.hbm [shape: f32[8,8], index: 1, kind: input, shape index: {}]
  %s2 = inlined_call_operand.hbm [shape: f32[16,32], index: 2, kind: input, shape index: {}]
  %s3 = inlined_call_operand.hbm [shape: f32[8,32], index: 3, kind: input, shape index: {}]
  %s4 = inlined_call_operand.hbm [shape: f32[32,32], index: 4, kind: input, shape index: {}]
  %s5 = inlined_call_operand.vmem [shape: f32[4,32], index: 5, kind: input, shape index: {}]
  %s6 = inlined_call_operand.vmem [shape: f32[1,32], index: 6, kind: input, shape index: {}]
  %s7 = inlined_call_operand.<no memory space> [shape: f32[1,1], index: 7, kind: input, shape index: {}]
  %s8 = inlined_call_operand.vmem [shape: f32[8,1], index: 8, kind: output, shape index: {}]
  %s9 = sld [smem:[#allocation0]]
  $region62: #{tpu_custom_call.1} parent=0
    _
  %s11 = ssub.s32 1, %s9
  %s12 = scalar_select 0, %s11, %s9
  %13 = sst [smem:[#allocation2]] %s7
  $region1: #{tpu_custom_call.1} parent=0
    #allocation3 [shape = 'u8[4096]{0}', space=vmem, size = 0x1000, scoped, tag = 'input window, operand 0, single buffered']
    #allocation4 [shape = 's32[1]{0}', space=sflag, size = 0x4, scoped, tag = 'scoped memory for tpu_custom_call.1']
    #allocation5 [shape = 'u8[4096]{0}', space=vmem, size = 0x1000, scoped, tag = 'input window, operand 1, single buffered']
    #allocation6 [shape = 's32[1]{0}', space=sflag, size = 0x4, scoped, tag = 'scoped memory for tpu_custom_call.1']
    #allocation7 [shape = 'u8[8192]{0}', space=vmem, size = 0x2000, scoped, tag = 'input window, operand 2, single buffered']
    #allocation8 [shape = 'u8[4096]{0}', space=vmem, size = 0x1000, scoped, tag = 'input window, operand 3, single buffered']
    #allocation9 [shape = 's32[1]{0}', space=sflag, size = 0x4, scoped, tag = 'scoped memory for tpu_custom_call.1']
    #allocation10 [shape = 'u8[16384]{0}', space=vmem, size = 0x4000, scoped, tag = 'input window, operand 4, single buffered']
    %14 = vsyncpa [#allocation4], 0
    %15 = vsyncpa [#allocation6], 0
    %16 = vsyncpa [#allocation9], 0
    // Predicated region
    $region2: #{tpu_custom_call.1} parent=1 // pred_check
      _
    $region3: #{tpu_custom_call.1} parent=1 // pred_check_branch
      %18 = sbr.rel (0) target = $region5
    $region4: #{tpu_custom_call.1} parent=1 // pred_region
      %20 = vsyncadd [#allocation4], 0
      %s22 = sshll.u32 %s0, 4
      %s23 = int_to_ptr.hbm [resolvable:$true] %s22
      %s24 = sshll.u32 [#allocation3], 4
      %s25 = int_to_ptr.vmem [resolvable:$true] %s24
      %27 = dma.hbm_to_vmem [thread:$0]  %s23, 128, %s25, [#allocation4]
    $region5: #{tpu_custom_call.1} parent=1 // pred_fallthru
      _
    // Predicated region
    $region6: #{tpu_custom_call.1} parent=1 // pred_check
      _
    $region7: #{tpu_custom_call.1} parent=1 // pred_check_branch
      %29 = sbr.rel (0) target = $region9
    $region8: #{tpu_custom_call.1} parent=1 // pred_region
      %31 = vsyncadd [#allocation6], 0
      %s33 = sshll.u32 %s1, 4
      %s34 = int_to_ptr.hbm [resolvable:$true] %s33
      %s35 = sshll.u32 [#allocation5], 4
      %s36 = int_to_ptr.vmem [resolvable:$true] %s35
      %38 = dma.hbm_to_vmem [thread:$0]  %s34, 128, %s36, [#allocation6]
    $region9: #{tpu_custom_call.1} parent=1 // pred_fallthru
      _
    // Predicated region
    $region10: #{tpu_custom_call.1} parent=1 // pred_check
      _
    $region11: #{tpu_custom_call.1} parent=1 // pred_check_branch
      %40 = sbr.rel (0) target = $region13
    $region12: #{tpu_custom_call.1} parent=1 // pred_region
      %42 = vsyncadd [#allocation6], 0
      %s43 = sshll.u32 %s2, 4
      %s44 = int_to_ptr.hbm [resolvable:$true] %s43
      %s45 = sshll.u32 [#allocation7], 4
      %s46 = int_to_ptr.vmem [resolvable:$true] %s45
      %51 = dma.hbm_to_vmem [thread:$0]  %s44, 256, %s46, [#allocation6], 128, 128, 8
    $region13: #{tpu_custom_call.1} parent=1 // pred_fallthru
      _
    // Predicated region
    $region14: #{tpu_custom_call.1} parent=1 // pred_check
      _
    $region15: #{tpu_custom_call.1} parent=1 // pred_check_branch
      %53 = sbr.rel (0) target = $region17
    $region16: #{tpu_custom_call.1} parent=1 // pred_region
      %55 = vsyncadd [#allocation9], 0
      %s57 = sshll.u32 %s3, 4
      %s58 = int_to_ptr.hbm [resolvable:$true] %s57
      %s59 = sshll.u32 [#allocation8], 4
      %s60 = int_to_ptr.vmem [resolvable:$true] %s59
      %62 = dma.hbm_to_vmem [thread:$0]  %s58, 128, %s60, [#allocation9]
    $region17: #{tpu_custom_call.1} parent=1 // pred_fallthru
      _
    // Predicated region
    $region18: #{tpu_custom_call.1} parent=1 // pred_check
      _
    $region19: #{tpu_custom_call.1} parent=1 // pred_check_branch
      %64 = sbr.rel (0) target = $region21
    $region20: #{tpu_custom_call.1} parent=1 // pred_region
      %66 = vsyncadd [#allocation9], 0
      %s67 = sshll.u32 %s4, 4
      %s68 = int_to_ptr.hbm [resolvable:$true] %s67
      %s69 = sshll.u32 [#allocation10], 4
      %s70 = int_to_ptr.vmem [resolvable:$true] %s69
      %75 = dma.hbm_to_vmem [thread:$0]  %s68, 512, %s70, [#allocation9], 128, 128, 8
    $region21: #{tpu_custom_call.1} parent=1 // pred_fallthru
      _
    // Predicated region
    $region22: #{tpu_custom_call.1} parent=1 // pred_check
      _
    $region23: #{tpu_custom_call.1} parent=1 // pred_check_branch
      %77 = sbr.rel (0) target = $region25
    $region24: #{tpu_custom_call.1} parent=1 // pred_region
      _
    $region25: #{tpu_custom_call.1} parent=1 // pred_fallthru
      _
    // Predicated region
    $region26: #{tpu_custom_call.1} parent=1 // pred_check
      _
    $region27: #{tpu_custom_call.1} parent=1 // pred_check_branch
      %79 = sbr.rel (0) target = $region29
    $region28: #{tpu_custom_call.1} parent=1 // pred_region
      _
    $region29: #{tpu_custom_call.1} parent=1 // pred_fallthru
      _
    // Predicated region
    $region30: #{tpu_custom_call.1} parent=1 // pred_check
      _
    $region31: #{tpu_custom_call.1} parent=1 // pred_check_branch
      %81 = sbr.rel (0) target = $region33
    $region32: #{tpu_custom_call.1} parent=1 // pred_region
      _
    $region33: #{tpu_custom_call.1} parent=1 // pred_fallthru
      _
    // Predicated region
    $region34: #{tpu_custom_call.1} parent=1 // pred_check
      _
    $region35: #{tpu_custom_call.1} parent=1 // pred_check_branch
      %83 = sbr.rel (0) target = $region37
    $region36: #{tpu_custom_call.1} parent=1 // pred_region
      %85 = dma.done [#allocation4], 128
    $region37: #{tpu_custom_call.1} parent=1 // pred_fallthru
      _
    // Predicated region
    $region38: #{tpu_custom_call.1} parent=1 // pred_check
      _
    $region39: #{tpu_custom_call.1} parent=1 // pred_check_branch
      %87 = sbr.rel (0) target = $region41
    $region40: #{tpu_custom_call.1} parent=1 // pred_region
      %89 = dma.done [#allocation6], 128
    $region41: #{tpu_custom_call.1} parent=1 // pred_fallthru
      _
    // Predicated region
    $region42: #{tpu_custom_call.1} parent=1 // pred_check
      _
    $region43: #{tpu_custom_call.1} parent=1 // pred_check_branch
      %91 = sbr.rel (0) target = $region45
    $region44: #{tpu_custom_call.1} parent=1 // pred_region
      %93 = dma.done [#allocation6], 256
    $region45: #{tpu_custom_call.1} parent=1 // pred_fallthru
      _
    // Predicated region
    $region46: #{tpu_custom_call.1} parent=1 // pred_check
      _
    $region47: #{tpu_custom_call.1} parent=1 // pred_check_branch
      %95 = sbr.rel (0) target = $region49
    $region48: #{tpu_custom_call.1} parent=1 // pred_region
      %97 = dma.done [#allocation9], 128
    $region49: #{tpu_custom_call.1} parent=1 // pred_fallthru
      _
    // Predicated region
    $region50: #{tpu_custom_call.1} parent=1 // pred_check
      _
    $region51: #{tpu_custom_call.1} parent=1 // pred_check_branch
      %99 = sbr.rel (0) target = $region53
    $region52: #{tpu_custom_call.1} parent=1 // pred_region
      %101 = dma.done [#allocation9], 512
    $region53: #{tpu_custom_call.1} parent=1 // pred_fallthru
      _
    %v103 = vld [vmem:[#allocation3] sm:$0xff]
    %v104 = vpack.c.bf16 %v103, %v103
    %v105 = vld [vmem:[#allocation7] sm:$0xff]
    %v106 = vld [vmem:[#allocation7 + $0x8] sm:$0xff]
    %v107 = vpack.c.bf16 %v106, %v105
    %v108 = vld [vmem:[#allocation5] sm:$0xff]
    %v109 = vpack.c.bf16 %v108, %v108
    %v110 = vld [vmem:[#allocation8] sm:$0xff]
    %v111 = vpack.c.bf16 %v110, %v110
    %vm112 = vcmask 64512
    %v114 = vsel %vm112, %v109, 0
    %vm116 = vcmask 1043456
    %v118 = vsel %vm116, %v111, 0
    %120 = vmatpush.bf16.msra.mxu0 0
    %121 = vmatpush.bf16.msra.mxu0 0
    %122 = vmatpush.bf16.msra.mxu0 0
    %123 = vmatpush.bf16.msra.mxu0 0
    %124 = vmatpush.bf16.msra.mxu0 0
    %125 = vmatpush.bf16.msra.mxu0 0
    %126 = vmatpush.bf16.msra.mxu0 0
    %127 = vmatpush.bf16.msra.mxu0 %v118
    %128 = vmatmul.bf16.gmra.mxu0 %v114
    %v129 = vpop.f32.mrf.mxu0
    %v130 = vadd.f32 0.0, %v129
    %v131 = vpop.f32.mrf.mxu0
    %132 = vdwg.mxu0
    %vm133 = vcmask 130048
    %v135 = vsel %vm133, %v104, 0
    %137 = vmatpush.bf16.msra.mxu0 0
    %138 = vmatpush.bf16.msra.mxu0 0
    %139 = vmatpush.bf16.msra.mxu0 0
    %140 = vmatpush.bf16.msra.mxu0 0
    %141 = vmatpush.bf16.msra.mxu0 0
    %142 = vmatpush.bf16.msra.mxu0 0
    %143 = vmatpush.bf16.msra.mxu0 0
    %144 = vmatpush.bf16.msra.mxu0 %v107
    %145 = vmatmul.bf16.gmra.mxu0 %v135
    %v146 = vpop.f32.mrf.mxu0
    %v147 = vadd.f32 %v130, %v146
    %v148 = vpop.f32.mrf.mxu0
    %149 = vdwg.mxu0
    %vm150 = vcmask 261120
    %v151 = vsel %vm150, %v147, 0.0
    %v152 = vrot.slane %v151, 4
    %v153 = vadd.f32 %v151, %v152
    %v154 = vrot.slane %v153, 2
    %v155 = vadd.f32 %v153, %v154
    %v156 = vrot.slane %v155, 1
    %v157 = vadd.f32 %v155, %v156
    %v158 = vmul.f32 %v147, %v147
    %v159 = vsel %vm150, %v158, 0.0
    %v160 = vrot.slane %v159, 4
    %v161 = vadd.f32 %v159, %v160
    %v162 = vrot.slane %v161, 2
    %v163 = vadd.f32 %v161, %v162
    %v164 = vrot.slane %v163, 1
    %v165 = vadd.f32 %v163, %v164
    %v166 = vmul.f32 %v157, 0.125
    %v167 = vmul.f32 %v165, 0.125
    %v168 = vmul.f32 %v166, %v166
    %v169 = vsub.f32 %v167, %v168
    %v170 = vadd.f32 %v169, 1e-05
    %v171 = vrsqrt.pop %v170
    %v172 = vmul.f32 %v171, %v170
    %v173 = vmul.f32 %v172, %v171
    %v174 = vmul.f32 0.5, %v173
    %v175 = vsub.f32 1.5, %v174
    %v176 = vmul.f32 %v171, %v175
    %vm177 = vweird.f32 %v170
    %vm178 = vweird.f32 %v171
    %vm179 = vmor %vm177, %vm178
    %v180 = vsel %vm179, %v171, %v176
    %v181 = vld [vmem:[%s5] sm:$0x1]
    %v182 = vmul.f32 %v180, %v181
    %v183 = vld [vmem:[%s5 + $0x1] sm:$0x1]
    %v184 = vmul.f32 %v166, %v182
    %v185 = vsub.f32 %v183, %v184
    %v186 = vperm.slane %v182, 0
    %v187 = vmul.f32 %v147, %v186
    %v188 = vperm.slane %v185, 0
    %v189 = vadd.f32 %v187, %v188
    %v190 = vmax.f32 %v189, 0.0
    %v191 = vpack.c.bf16 %v190, %v190
    %v192 = vld [vmem:[#allocation10] sm:$0xff]
    %v193 = vld [vmem:[#allocation10 + $0x8] sm:$0xff]
    %v194 = vld [vmem:[#allocation10 + $0x10] sm:$0xff]
    %v195 = vld [vmem:[#allocation10 + $0x18] sm:$0xff]
    %v196 = vpack.c.bf16 %v193, %v192
    %v197 = vpack.c.bf16 %v195, %v194
    %v199 = vsel %vm150, %v191, 0
    %201 = vmatpush.bf16.msra.mxu0 0
    %202 = vmatpush.bf16.msra.mxu0 0
    %203 = vmatpush.bf16.msra.mxu0 0
    %204 = vmatpush.bf16.msra.mxu0 0
    %205 = vmatpush.bf16.msra.mxu0 0
    %206 = vmatpush.bf16.msra.mxu0 0
    %207 = vmatpush.bf16.msra.mxu0 %v197
    %208 = vmatpush.bf16.msra.mxu0 %v196
    %209 = vmatmul.bf16.gmra.mxu0 %v199
    %v210 = vpop.f32.mrf.mxu0
    %v211 = vadd.f32 0.0, %v210
    %v212 = vpop.f32.mrf.mxu0
    %213 = vdwg.mxu0
    %v214 = vsel %vm150, %v211, 0.0
    %v215 = vrot.slane %v214, 4
    %v216 = vadd.f32 %v214, %v215
    %v217 = vrot.slane %v216, 2
    %v218 = vadd.f32 %v216, %v217
    %v219 = vrot.slane %v218, 1
    %v220 = vadd.f32 %v218, %v219
    %v221 = vmul.f32 %v211, %v211
    %v222 = vsel %vm150, %v221, 0.0
    %v223 = vrot.slane %v222, 4
    %v224 = vadd.f32 %v222, %v223
    %v225 = vrot.slane %v224, 2
    %v226 = vadd.f32 %v224, %v225
    %v227 = vrot.slane %v226, 1
    %v228 = vadd.f32 %v226, %v227
    %v229 = vmul.f32 %v220, 0.125
    %v230 = vmul.f32 %v228, 0.125
    %v231 = vmul.f32 %v229, %v229
    %v232 = vsub.f32 %v230, %v231
    %v233 = vadd.f32 %v232, 1e-05
    %v234 = vrsqrt.pop %v233
    %v235 = vmul.f32 %v234, %v233
    %v236 = vmul.f32 %v235, %v234
    %v237 = vmul.f32 0.5, %v236
    %v238 = vsub.f32 1.5, %v237
    %v239 = vmul.f32 %v234, %v238
    %vm240 = vweird.f32 %v233
    %vm241 = vweird.f32 %v234
    %vm242 = vmor %vm240, %vm241
    %v243 = vsel %vm242, %v234, %v239
    %v244 = vld [vmem:[%s5 + $0x2] sm:$0x1]
    %v245 = vmul.f32 %v243, %v244
    %v246 = vld [vmem:[%s5 + $0x3] sm:$0x1]
    %v247 = vmul.f32 %v229, %v245
    %v248 = vsub.f32 %v246, %v247
    %v249 = vperm.slane %v245, 0
    %v250 = vmul.f32 %v211, %v249
    %v251 = vperm.slane %v248, 0
    %v252 = vadd.f32 %v250, %v251
    %v253 = vmax.f32 %v252, 0.0
    %v254 = vld [vmem:[%s6] sm:$0x1]
    %v256 = vperm.slane %v254, 0
    %v258 = vmul.f32 %v253, %v256
    %v259 = vsel %vm150, %v258, 0.0
    %260 = vadd.xlane.f32.xlu0 %v259
    %v261 = vpop.xlane.xlu0 %260
    %s262 = sld [smem:[#allocation2]]
    %v263 = vstv %s262
    %v264 = vadd.f32 %v261, %v263
    %vm265 = vcmask 7168
    %266 = vst.msk [vmem:[%s8] sm:$0xff] %vm265, %v264
    // Predicated region
    $region54: #{tpu_custom_call.1} parent=1 // pred_check
      _
    $region55: #{tpu_custom_call.1} parent=1 // pred_check_branch
      %268 = sbr.rel (0) target = $region57
    $region56: #{tpu_custom_call.1} parent=1 // pred_region
      _
    $region57: #{tpu_custom_call.1} parent=1 // pred_fallthru
      _
    // Predicated region
    $region58: #{tpu_custom_call.1} parent=1 // pred_check
      _
    $region59: #{tpu_custom_call.1} parent=1 // pred_check_branch
      %270 = sbr.rel (0) target = $region61
    $region60: #{tpu_custom_call.1} parent=1 // pred_region
      _
    $region61: #{tpu_custom_call.1} parent=1 // pred_fallthru
      _
    %271 = vsyncpa [#allocation4], 1
    %272 = vsyncpa [#allocation6], 1
    %273 = vsyncpa [#allocation9], 1

</llo_original>
